<compile_context>
chip_gen: v6e
topology: v6e:2x2x1
jax: 0.10.0
libtpu: 0.0.40
codegen_flags: <defaults>
</compile_context>

<pallas_src>
import functools

import jax
import jax.numpy as jnp
from jax.experimental import pallas as pl
from jax.experimental.pallas import tpu as pltpu

# Default batch tile: >=512 amortizes the ~0.35us/step overhead; multiple of 16
# to match bf16 sublane packing; double-buffered footprint stays far below the
# scoped-VMEM default on every generation (v5e 16 MiB .. v7x 32 MiB).
DEFAULT_TB = 1024


def _round_up(x, m):
    return ((x + m - 1) // m) * m


def _fused_mlp_kernel(*refs, n_layers):
    """refs = (x_ref, w0, b0, w1, b1, ..., w_{L-1}, b_{L-1}, o_ref).

    Runs the whole MLP on one batch tile: hidden layers get ReLU (eval-mode
    dropout == identity), last layer is a plain Linear.  All intermediates stay
    in vregs/VMEM; only the final (TB, n_out) activation is stored.
    """
    x_ref = refs[0]
    o_ref = refs[-1]
    wb_refs = refs[1:-1]

    h = x_ref[...]                              # (TB, in_dim), compute dtype (bf16)
    for i in range(n_layers):
        w = wb_refs[2 * i][...]                 # (in, out), compute dtype
        b = wb_refs[2 * i + 1][...]             # (1, out), broadcast over batch
        h = jnp.dot(h, w, preferred_element_type=jnp.float32) + b.astype(jnp.float32)
        if i < n_layers - 1:
            h = jnp.maximum(h, 0.0)             # ReLU; eval-mode dropout == identity
            h = h.astype(w.dtype)               # back to bf16 -> native MXU path
    o_ref[...] = h.astype(o_ref.dtype)


def prepare_params(params, compute_dtype=jnp.bfloat16):
    """One-time parameter prep (hoisted out of the hot path).

    Returns a flat list [w0, b0_2d, w1, b1_2d, ...] with weights as
    [in, out] and biases reshaped to (1, out), all cast to `compute_dtype`.
    """
    flat = []
    for w, b in params:
        flat.append(w.astype(compute_dtype))
        flat.append(b.reshape(1, -1).astype(compute_dtype))
    return flat


def color_constancy_forward(x, params, *, tb=DEFAULT_TB,
                            compute_dtype=jnp.bfloat16,
                            out_dtype=jnp.float32):
    """Forward pass: one batch-tiled pallas_call for the entire network.

    x: (B, in_dim). params: list of (w [in, out], b [out]).  Returns (B, n_out).
    """
    B, in_dim = x.shape
    n_layers = len(params)
    n_out = params[-1][0].shape[1]

    flat_params = prepare_params(params, compute_dtype)
    x = x.astype(compute_dtype)

    # Batch tile: multiple of 16 (bf16 sublane packing), capped at `tb`.
    TB = min(_round_up(tb, 16), _round_up(B, 16))
    B_pad = _round_up(B, TB)
    if B_pad != B:
        x = jnp.pad(x, ((0, B_pad - B), (0, 0)))
    grid = (B_pad // TB,)

    # x / output tiled over the batch; every weight & bias is a full-shape
    # block with a constant index_map -> fetched once, VMEM-resident.
    in_specs = [pl.BlockSpec((TB, in_dim), lambda i: (i, 0))]
    for p in flat_params:
        in_specs.append(pl.BlockSpec(p.shape, lambda i: (0, 0)))
    out_spec = pl.BlockSpec((TB, n_out), lambda i: (i, 0))

    kernel = functools.partial(_fused_mlp_kernel, n_layers=n_layers)

    out = pl.pallas_call(
        kernel,
        out_shape=jax.ShapeDtypeStruct((B_pad, n_out), out_dtype),
        grid=grid,
        in_specs=in_specs,
        out_specs=out_spec,
        compiler_params=pltpu.CompilerParams(
            dimension_semantics=("parallel",)),   # v7x: shard tiles over both TCs
    )(x, *flat_params)

    if B_pad != B:
        out = out[:B]
    return out


def init_params(network_arch, dtype=jnp.float32):
    """Deterministic parameter init matching nn.Linear shapes.

    For each (in_size, out_size): weight [in_size, out_size], bias [out_size].
    (PyTorch stores weight as [out, in]; we keep the transposed layout so the
    kernel does x @ W directly.)
    """
    params = []
    key = jax.random.PRNGKey(42)
    for li, (in_size, out_size) in enumerate(network_arch):
        kw, kb = jax.random.split(jax.random.fold_in(key, li))
        bound = 1.0 / jnp.sqrt(jnp.float32(in_size))
        w = jax.random.uniform(kw, (in_size, out_size), dtype, -bound, bound)
        b = jax.random.uniform(kb, (out_size,), dtype, -bound, bound)
        params.append((w, b))
    return params


def reference_forward(x, params):
    """Pure-JAX f32 reference for correctness checking."""
    n_layers = len(params)
    for i in range(n_layers - 1):
        w, b = params[i]
        x = jnp.maximum(x @ w + b, 0.0)
    w, b = params[-1]
    return x @ w + b


if __name__ == "__main__":
    # Small network: 32 -> 64 -> 32 -> 3 (e.g. predicting an RGB illuminant).
    network_arch = [(32, 64), (64, 32), (32, 3)]
    batch = 40          # not a multiple of the tile -> exercises padding/slice
    tile = 16           # small tile so the demo exercises a multi-step grid

    params = init_params(network_arch)
    x = jax.random.normal(jax.random.PRNGKey(0), (batch, network_arch[0][0]),
                          dtype=jnp.float32)

    out = color_constancy_forward(x, params, tb=tile)
    out = jax.block_until_ready(out)

    ref = reference_forward(x, params)
    assert out.shape == (batch, network_arch[-1][1]), out.shape
    # bf16 inputs/weights with f32 accumulation vs a pure-f32 reference:
    # expect ~1% relative error through 3 layers.
    assert jnp.allclose(out.astype(jnp.float32), ref, atol=5e-2, rtol=5e-2), \
        "mismatch vs reference"

    print("KERNEL_OK")
</pallas_src>

<mosaic_0001>
module attributes {stable_mosaic.version = 11 : i64} {
  func.func @_fused_mlp_kernel(%arg0: i32, %arg1: memref<16x32xbf16, #tpu.memory_space<vmem>>, %arg2: memref<32x64xbf16, #tpu.memory_space<vmem>>, %arg3: memref<1x64xbf16, #tpu.memory_space<vmem>>, %arg4: memref<64x32xbf16, #tpu.memory_space<vmem>>, %arg5: memref<1x32xbf16, #tpu.memory_space<vmem>>, %arg6: memref<32x3xbf16, #tpu.memory_space<vmem>>, %arg7: memref<1x3xbf16, #tpu.memory_space<vmem>>, %arg8: memref<16x3xf32, #tpu.memory_space<vmem>>) attributes {dimension_semantics = [#tpu.dimension_semantics<parallel>], iteration_bounds = array<i64: 3>, scalar_prefetch = 0 : i64, scratch_operands = 0 : i64, tpu.core_type = #tpu.core_type<tc>, window_params = [{transform_indices = @transform_0, window_bounds = array<i64: 16, 32>}, {pipeline_mode = #tpu.pipeline_mode<synchronous>, transform_indices = @transform_1, window_bounds = array<i64: 32, 64>}, {pipeline_mode = #tpu.pipeline_mode<synchronous>, transform_indices = @transform_2, window_bounds = array<i64: 1, 64>}, {pipeline_mode = #tpu.pipeline_mode<synchronous>, transform_indices = @transform_3, window_bounds = array<i64: 64, 32>}, {pipeline_mode = #tpu.pipeline_mode<synchronous>, transform_indices = @transform_4, window_bounds = array<i64: 1, 32>}, {pipeline_mode = #tpu.pipeline_mode<synchronous>, transform_indices = @transform_5, window_bounds = array<i64: 32, 3>}, {pipeline_mode = #tpu.pipeline_mode<synchronous>, transform_indices = @transform_6, window_bounds = array<i64: 1, 3>}, {transform_indices = @transform_7, window_bounds = array<i64: 16, 3>}]} {
    %c0 = arith.constant 0 : index
    %c0_0 = arith.constant 0 : index
    %0 = vector.load %arg1[%c0, %c0_0] : memref<16x32xbf16, #tpu.memory_space<vmem>>, vector<16x32xbf16>
    %c0_1 = arith.constant 0 : index
    %c0_2 = arith.constant 0 : index
    %1 = vector.load %arg2[%c0_1, %c0_2] : memref<32x64xbf16, #tpu.memory_space<vmem>>, vector<32x64xbf16>
    %c0_3 = arith.constant 0 : index
    %c0_4 = arith.constant 0 : index
    %2 = vector.load %arg3[%c0_3, %c0_4] : memref<1x64xbf16, #tpu.memory_space<vmem>>, vector<1x64xbf16>
    %cst = arith.constant dense<0.000000e+00> : vector<16x64xf32>
    %3 = tpu.matmul %0, %1, %cst {dimension_numbers = #tpu.dot_dimension_numbers<[1], [0], [0], [1], [0, 0, 1, 1], [], []>} : vector<16x32xbf16>, vector<32x64xbf16>, vector<16x64xf32> -> vector<16x64xf32>
    %4 = arith.extf %2 : vector<1x64xbf16> to vector<1x64xf32>
    %5 = vector.broadcast %4 : vector<1x64xf32> to vector<16x64xf32>
    %6 = arith.addf %3, %5 : vector<16x64xf32>
    %cst_5 = arith.constant 0.000000e+00 : f32
    %7 = vector.broadcast %cst_5 : f32 to vector<16x64xf32>
    %8 = arith.maximumf %6, %7 : vector<16x64xf32>
    %9 = arith.truncf %8 : vector<16x64xf32> to vector<16x64xbf16>
    %c0_6 = arith.constant 0 : index
    %c0_7 = arith.constant 0 : index
    %10 = vector.load %arg4[%c0_6, %c0_7] : memref<64x32xbf16, #tpu.memory_space<vmem>>, vector<64x32xbf16>
    %c0_8 = arith.constant 0 : index
    %c0_9 = arith.constant 0 : index
    %11 = vector.load %arg5[%c0_8, %c0_9] : memref<1x32xbf16, #tpu.memory_space<vmem>>, vector<1x32xbf16>
    %cst_10 = arith.constant dense<0.000000e+00> : vector<16x32xf32>
    %12 = tpu.matmul %9, %10, %cst_10 {dimension_numbers = #tpu.dot_dimension_numbers<[1], [0], [0], [1], [0, 0, 1, 1], [], []>} : vector<16x64xbf16>, vector<64x32xbf16>, vector<16x32xf32> -> vector<16x32xf32>
    %13 = arith.extf %11 : vector<1x32xbf16> to vector<1x32xf32>
    %14 = vector.broadcast %13 : vector<1x32xf32> to vector<16x32xf32>
    %15 = arith.addf %12, %14 : vector<16x32xf32>
    %cst_11 = arith.constant 0.000000e+00 : f32
    %16 = vector.broadcast %cst_11 : f32 to vector<16x32xf32>
    %17 = arith.maximumf %15, %16 : vector<16x32xf32>
    %18 = arith.truncf %17 : vector<16x32xf32> to vector<16x32xbf16>
    %c0_12 = arith.constant 0 : index
    %c0_13 = arith.constant 0 : index
    %19 = vector.load %arg6[%c0_12, %c0_13] : memref<32x3xbf16, #tpu.memory_space<vmem>>, vector<32x3xbf16>
    %c0_14 = arith.constant 0 : index
    %c0_15 = arith.constant 0 : index
    %20 = vector.load %arg7[%c0_14, %c0_15] : memref<1x3xbf16, #tpu.memory_space<vmem>>, vector<1x3xbf16>
    %cst_16 = arith.constant dense<0.000000e+00> : vector<16x3xf32>
    %21 = tpu.matmul %18, %19, %cst_16 {dimension_numbers = #tpu.dot_dimension_numbers<[1], [0], [0], [1], [0, 0, 1, 1], [], []>} : vector<16x32xbf16>, vector<32x3xbf16>, vector<16x3xf32> -> vector<16x3xf32>
    %22 = arith.extf %20 : vector<1x3xbf16> to vector<1x3xf32>
    %23 = vector.broadcast %22 : vector<1x3xf32> to vector<16x3xf32>
    %24 = arith.addf %21, %23 : vector<16x3xf32>
    %c0_17 = arith.constant 0 : index
    %c0_18 = arith.constant 0 : index
    %25 = vector.load %arg8[%c0_17, %c0_18] : memref<16x3xf32, #tpu.memory_space<vmem>>, vector<16x3xf32>
    tpu.vector_store %arg8[%c0_17, %c0_18], %24 {strides = array<i32>} : memref<16x3xf32, #tpu.memory_space<vmem>>, vector<16x3xf32>,
    return
  }
  func.func @transform_0(%arg0: i32) -> (i32, i32) {
    %c0_i32 = arith.constant 0 : i32
    %c0_i32_0 = arith.constant 0 : i32
    return %arg0, %c0_i32 : i32, i32
  }
  func.func @transform_1(%arg0: i32) -> (i32, i32) {
    %c0_i32 = arith.constant 0 : i32
    %c0_i32_0 = arith.constant 0 : i32
    %c0_i32_1 = arith.constant 0 : i32
    return %c0_i32, %c0_i32_0 : i32, i32
  }
  func.func @transform_2(%arg0: i32) -> (i32, i32) {
    %c0_i32 = arith.constant 0 : i32
    %c0_i32_0 = arith.constant 0 : i32
    %c0_i32_1 = arith.constant 0 : i32
    return %c0_i32, %c0_i32_0 : i32, i32
  }
  func.func @transform_3(%arg0: i32) -> (i32, i32) {
    %c0_i32 = arith.constant 0 : i32
    %c0_i32_0 = arith.constant 0 : i32
    %c0_i32_1 = arith.constant 0 : i32
    return %c0_i32, %c0_i32_0 : i32, i32
  }
  func.func @transform_4(%arg0: i32) -> (i32, i32) {
    %c0_i32 = arith.constant 0 : i32
    %c0_i32_0 = arith.constant 0 : i32
    %c0_i32_1 = arith.constant 0 : i32
    return %c0_i32, %c0_i32_0 : i32, i32
  }
  func.func @transform_5(%arg0: i32) -> (i32, i32) {
    %c0_i32 = arith.constant 0 : i32
    %c0_i32_0 = arith.constant 0 : i32
    %c0_i32_1 = arith.constant 0 : i32
    return %c0_i32, %c0_i32_0 : i32, i32
  }
  func.func @transform_6(%arg0: i32) -> (i32, i32) {
    %c0_i32 = arith.constant 0 : i32
    %c0_i32_0 = arith.constant 0 : i32
    %c0_i32_1 = arith.constant 0 : i32
    return %c0_i32, %c0_i32_0 : i32, i32
  }
  func.func @transform_7(%arg0: i32) -> (i32, i32) {
    %c0_i32 = arith.constant 0 : i32
    %c0_i32_0 = arith.constant 0 : i32
    return %arg0, %c0_i32 : i32, i32
  }
}

</mosaic_0001>

<llo_original>
// kernel: tpu_custom_call.1
$region0: #{tpu_custom_call.1}
  #allocation0 [shape = 'u32[]', space=smem, size = 0x4, offset = 0x4, fixed_abs, tag = 'smem constant byte address 0x4 - core index']
  #allocation1 [shape = 'u32[144,128]{1,0:T(1,128)}', space=vmem, size = 0x12000, scoped, tag = 'internal scratch']
  %s0 = inlined_call_operand.vmem [shape: bf16[48,32], index: 0, kind: input, shape index: {}]
  %s1 = inlined_call_operand.vmem [shape: bf16[32,64], index: 1, kind: input, shape index: {}]
  %s2 = inlined_call_operand.vmem [shape: bf16[1,64], index: 2, kind: input, shape index: {}]
  %s3 = inlined_call_operand.vmem [shape: bf16[64,32], index: 3, kind: input, shape index: {}]
  %s4 = inlined_call_operand.vmem [shape: bf16[1,32], index: 4, kind: input, shape index: {}]
  %s5 = inlined_call_operand.vmem [shape: bf16[32,3], index: 5, kind: input, shape index: {}]
  %s6 = inlined_call_operand.vmem [shape: bf16[1,3], index: 6, kind: input, shape index: {}]
  %s7 = inlined_call_operand.vmem [shape: f32[48,3], index: 7, kind: output, shape index: {}]
  %s8 = sld [smem:[#allocation0]]
  $region61: #{tpu_custom_call.1} parent=0
    _
  %s10 = ssub.s32 1, %s8
  %s11 = scalar_select 0, %s10, %s8
  loop: start=0, step=1, limit=5
  $region2: #{tpu_custom_call.1} parent=0 // loop_pre_header
    _
  $region3: #{tpu_custom_call.1} parent=0 // loop_header
    %s13 = sphi 0, %s17
    %p14 = scmp.ge.s32.totalorder %s13, 5
    %s23 = sphi 0, %s25
    %s26 = sphi 0, %s23
    %s27 = sphi 0, %s26
    %s43 = sphi 0, %s27
    %s47 = sphi 0, %s47
    %s49 = sphi 0, %s47
    %s50 = sphi 0, %s49
    %s64 = sphi 0, %s50
    %s68 = sphi 0, %s68
    %s70 = sphi 0, %s68
    %s71 = sphi 0, %s70
    %s85 = sphi 0, %s71
    %s89 = sphi 0, %s89
    %s91 = sphi 0, %s89
    %s92 = sphi 0, %s91
    %s106 = sphi 0, %s92
    %s110 = sphi 0, %s110
    %s112 = sphi 0, %s110
    %s113 = sphi 0, %s112
    %s127 = sphi 0, %s113
    %s131 = sphi 0, %s131
    %s133 = sphi 0, %s131
    %s134 = sphi 0, %s133
    %s148 = sphi 0, %s134
    %s152 = sphi 0, %s152
    %s154 = sphi 0, %s152
    %s155 = sphi 0, %s154
    %s169 = sphi 0, %s155
    %s175 = sphi 0, %s177
    %s178 = sphi 0, %s175
    %s179 = sphi 0, %s178
    %s195 = sphi 0, %s179
  $region4: #{tpu_custom_call.1} parent=0 // loop_header_branch
    %16 = sbr.rel (%p14) target = $region8
  $region5: #{tpu_custom_call.1} parent=0 // loop_body
    %s18 = ssub.s32 %s13, 1
    %s19 = ssub.s32 %s13, 2
    %s20 = sadd.s32 %s13, 1
    %s21 = ssub.s32 %s13, %s20
    %p22 = scmp.eq.s32.totalorder %s21, 0
    %s24 = sadd.s32 %s23, 1
    %s25 = scalar_select %p22, %s23, %s24
    %p28 = pneg %p22
    %p29 = scmp.eq.s32.totalorder %s13, 2
    %p30 = por %p28, %p29
    %p31 = scmp.ne.s32.totalorder %s23, %s26
    %p32 = scmp.eq.s32.totalorder %s13, 0
    %p33 = por %p31, %p32
    %p34 = scmp.ne.s32.totalorder %s23, %s26
    %p35 = scmp.eq.s32.totalorder %s18, 2
    %p36 = por %p34, %p35
    %p37 = scmp.ne.s32.totalorder %s26, %s27
    %p38 = scmp.eq.s32.totalorder %s18, 0
    %p39 = por %p37, %p38
    %p40 = scmp.ne.s32.totalorder %s26, %s27
    %p41 = scmp.eq.s32.totalorder %s19, 2
    %p42 = por %p40, %p41
    %p44 = scmp.ne.s32.totalorder %s27, %s43
    %p45 = scmp.eq.s32.totalorder %s19, 0
    %p46 = por %p44, %p45
    %s48 = sadd.s32 %s47, 1
    %p51 = scmp.eq.s32.totalorder %s13, 2
    %p52 = scmp.ne.s32.totalorder %s47, %s49
    %p53 = scmp.eq.s32.totalorder %s13, 0
    %p54 = por %p52, %p53
    %p55 = scmp.ne.s32.totalorder %s47, %s49
    %p56 = scmp.eq.s32.totalorder %s18, 2
    %p57 = por %p55, %p56
    %p58 = scmp.ne.s32.totalorder %s49, %s50
    %p59 = scmp.eq.s32.totalorder %s18, 0
    %p60 = por %p58, %p59
    %p61 = scmp.ne.s32.totalorder %s49, %s50
    %p62 = scmp.eq.s32.totalorder %s19, 2
    %p63 = por %p61, %p62
    %p65 = scmp.ne.s32.totalorder %s50, %s64
    %p66 = scmp.eq.s32.totalorder %s19, 0
    %p67 = por %p65, %p66
    %s69 = sadd.s32 %s68, 1
    %p72 = scmp.eq.s32.totalorder %s13, 2
    %p73 = scmp.ne.s32.totalorder %s68, %s70
    %p74 = scmp.eq.s32.totalorder %s13, 0
    %p75 = por %p73, %p74
    %p76 = scmp.ne.s32.totalorder %s68, %s70
    %p77 = scmp.eq.s32.totalorder %s18, 2
    %p78 = por %p76, %p77
    %p79 = scmp.ne.s32.totalorder %s70, %s71
    %p80 = scmp.eq.s32.totalorder %s18, 0
    %p81 = por %p79, %p80
    %p82 = scmp.ne.s32.totalorder %s70, %s71
    %p83 = scmp.eq.s32.totalorder %s19, 2
    %p84 = por %p82, %p83
    %p86 = scmp.ne.s32.totalorder %s71, %s85
    %p87 = scmp.eq.s32.totalorder %s19, 0
    %p88 = por %p86, %p87
    %s90 = sadd.s32 %s89, 1
    %p93 = scmp.eq.s32.totalorder %s13, 2
    %p94 = scmp.ne.s32.totalorder %s89, %s91
    %p95 = scmp.eq.s32.totalorder %s13, 0
    %p96 = por %p94, %p95
    %p97 = scmp.ne.s32.totalorder %s89, %s91
    %p98 = scmp.eq.s32.totalorder %s18, 2
    %p99 = por %p97, %p98
    %p100 = scmp.ne.s32.totalorder %s91, %s92
    %p101 = scmp.eq.s32.totalorder %s18, 0
    %p102 = por %p100, %p101
    %p103 = scmp.ne.s32.totalorder %s91, %s92
    %p104 = scmp.eq.s32.totalorder %s19, 2
    %p105 = por %p103, %p104
    %p107 = scmp.ne.s32.totalorder %s92, %s106
    %p108 = scmp.eq.s32.totalorder %s19, 0
    %p109 = por %p107, %p108
    %s111 = sadd.s32 %s110, 1
    %p114 = scmp.eq.s32.totalorder %s13, 2
    %p115 = scmp.ne.s32.totalorder %s110, %s112
    %p116 = scmp.eq.s32.totalorder %s13, 0
    %p117 = por %p115, %p116
    %p118 = scmp.ne.s32.totalorder %s110, %s112
    %p119 = scmp.eq.s32.totalorder %s18, 2
    %p120 = por %p118, %p119
    %p121 = scmp.ne.s32.totalorder %s112, %s113
    %p122 = scmp.eq.s32.totalorder %s18, 0
    %p123 = por %p121, %p122
    %p124 = scmp.ne.s32.totalorder %s112, %s113
    %p125 = scmp.eq.s32.totalorder %s19, 2
    %p126 = por %p124, %p125
    %p128 = scmp.ne.s32.totalorder %s113, %s127
    %p129 = scmp.eq.s32.totalorder %s19, 0
    %p130 = por %p128, %p129
    %s132 = sadd.s32 %s131, 1
    %p135 = scmp.eq.s32.totalorder %s13, 2
    %p136 = scmp.ne.s32.totalorder %s131, %s133
    %p137 = scmp.eq.s32.totalorder %s13, 0
    %p138 = por %p136, %p137
    %p139 = scmp.ne.s32.totalorder %s131, %s133
    %p140 = scmp.eq.s32.totalorder %s18, 2
    %p141 = por %p139, %p140
    %p142 = scmp.ne.s32.totalorder %s133, %s134
    %p143 = scmp.eq.s32.totalorder %s18, 0
    %p144 = por %p142, %p143
    %p145 = scmp.ne.s32.totalorder %s133, %s134
    %p146 = scmp.eq.s32.totalorder %s19, 2
    %p147 = por %p145, %p146
    %p149 = scmp.ne.s32.totalorder %s134, %s148
    %p150 = scmp.eq.s32.totalorder %s19, 0
    %p151 = por %p149, %p150
    %s153 = sadd.s32 %s152, 1
    %p156 = scmp.eq.s32.totalorder %s13, 2
    %p157 = scmp.ne.s32.totalorder %s152, %s154
    %p158 = scmp.eq.s32.totalorder %s13, 0
    %p159 = por %p157, %p158
    %p160 = scmp.ne.s32.totalorder %s152, %s154
    %p161 = scmp.eq.s32.totalorder %s18, 2
    %p162 = por %p160, %p161
    %p163 = scmp.ne.s32.totalorder %s154, %s155
    %p164 = scmp.eq.s32.totalorder %s18, 0
    %p165 = por %p163, %p164
    %p166 = scmp.ne.s32.totalorder %s154, %s155
    %p167 = scmp.eq.s32.totalorder %s19, 2
    %p168 = por %p166, %p167
    %p170 = scmp.ne.s32.totalorder %s155, %s169
    %p171 = scmp.eq.s32.totalorder %s19, 0
    %p172 = por %p170, %p171
    %s173 = ssub.s32 %s13, %s20
    %p174 = scmp.eq.s32.totalorder %s173, 0
    %s176 = sadd.s32 %s175, 1
    %s177 = scalar_select %p174, %s175, %s176
    %p180 = pneg %p174
    %p181 = scmp.eq.s32.totalorder %s13, 2
    %p182 = por %p180, %p181
    %p183 = scmp.ne.s32.totalorder %s175, %s178
    %p184 = scmp.eq.s32.totalorder %s13, 0
    %p185 = por %p183, %p184
    %p186 = scmp.ne.s32.totalorder %s175, %s178
    %p187 = scmp.eq.s32.totalorder %s18, 2
    %p188 = por %p186, %p187
    %p189 = scmp.ne.s32.totalorder %s178, %s179
    %p190 = scmp.eq.s32.totalorder %s18, 0
    %p191 = por %p189, %p190
    %p192 = scmp.ne.s32.totalorder %s178, %s179
    %p193 = scmp.eq.s32.totalorder %s19, 2
    %p194 = por %p192, %p193
    %p196 = scmp.ne.s32.totalorder %s179, %s195
    %p197 = scmp.eq.s32.totalorder %s19, 0
    %p198 = por %p196, %p197
    %p199 = scmp.le.s32.totalorder 1, %s13
    %p200 = scmp.lt.s32.totalorder %s13, 4
    %p201 = pnand %p199, %p200
    %p202 = pneg %p201
    // Predicated region
    $region9: #{tpu_custom_call.1} parent=5 // pred_check
      _
    $region10: #{tpu_custom_call.1} parent=5 // pred_check_branch
      %204 = sbr.rel (%p201) target = $region12
    $region11: #{tpu_custom_call.1} parent=5 // pred_region
      %s205 = ssub.s32 %s13, 1
      // Predicated region
      $region13: #{tpu_custom_call.1} parent=11 // pred_check
        %p206 = pneg %p60
      $region14: #{tpu_custom_call.1} parent=11 // pred_check_branch
        %208 = sbr.rel (%p206) target = $region16
      $region15: #{tpu_custom_call.1} parent=11 // pred_region
        _
      $region16: #{tpu_custom_call.1} parent=11 // pred_fallthru
        _
      // Predicated region
      $region17: #{tpu_custom_call.1} parent=11 // pred_check
        %p209 = pneg %p81
      $region18: #{tpu_custom_call.1} parent=11 // pred_check_branch
        %211 = sbr.rel (%p209) target = $region20
      $region19: #{tpu_custom_call.1} parent=11 // pred_region
        _
      $region20: #{tpu_custom_call.1} parent=11 // pred_fallthru
        _
      // Predicated region
      $region21: #{tpu_custom_call.1} parent=11 // pred_check
        %p212 = pneg %p102
      $region22: #{tpu_custom_call.1} parent=11 // pred_check_branch
        %214 = sbr.rel (%p212) target = $region24
      $region23: #{tpu_custom_call.1} parent=11 // pred_region
        _
      $region24: #{tpu_custom_call.1} parent=11 // pred_fallthru
        _
      // Predicated region
      $region25: #{tpu_custom_call.1} parent=11 // pred_check
        %p215 = pneg %p123
      $region26: #{tpu_custom_call.1} parent=11 // pred_check_branch
        %217 = sbr.rel (%p215) target = $region28
      $region27: #{tpu_custom_call.1} parent=11 // pred_region
        _
      $region28: #{tpu_custom_call.1} parent=11 // pred_fallthru
        _
      // Predicated region
      $region29: #{tpu_custom_call.1} parent=11 // pred_check
        %p218 = pneg %p144
      $region30: #{tpu_custom_call.1} parent=11 // pred_check_branch
        %220 = sbr.rel (%p218) target = $region32
      $region31: #{tpu_custom_call.1} parent=11 // pred_region
        _
      $region32: #{tpu_custom_call.1} parent=11 // pred_fallthru
        _
      // Predicated region
      $region33: #{tpu_custom_call.1} parent=11 // pred_check
        %p221 = pneg %p165
      $region34: #{tpu_custom_call.1} parent=11 // pred_check_branch
        %223 = sbr.rel (%p221) target = $region36
      $region35: #{tpu_custom_call.1} parent=11 // pred_region
        _
      $region36: #{tpu_custom_call.1} parent=11 // pred_fallthru
        _
    $region12: #{tpu_custom_call.1} parent=5 // pred_fallthru
      _
    %p224 = scmp.lt.s32.totalorder %s13, 3
    // Predicated region
    $region37: #{tpu_custom_call.1} parent=5 // pred_check
      %p225 = pneg %p224
    $region38: #{tpu_custom_call.1} parent=5 // pred_check_branch
      %227 = sbr.rel (%p225) target = $region40
    $region39: #{tpu_custom_call.1} parent=5 // pred_region
      // Predicated region
      $region41: #{tpu_custom_call.1} parent=39 // pred_check
        %p228 = pneg %p33
      $region42: #{tpu_custom_call.1} parent=39 // pred_check_branch
        %230 = sbr.rel (%p228) target = $region44
      $region43: #{tpu_custom_call.1} parent=39 // pred_region
        %s231 = smul.u32 2, %s13
        %p232 = scmp.lt.s32.totalorder %s231, 5
        %s233 = scalar_select %p232, %s231, 5
        %s234 = smul.addr %s233, 4
        %s235 = scalar_lea.vmem %s0, %s234
        %s236 = smul.u32 2, %s13
      $region44: #{tpu_custom_call.1} parent=39 // pred_fallthru
        _
    $region40: #{tpu_custom_call.1} parent=5 // pred_fallthru
      _
    %p237 = scmp.le.s32.totalorder 1, %s13
    %p238 = scmp.lt.s32.totalorder %s13, 4
    %p239 = pnand %p237, %p238
    %p240 = pneg %p239
    // Predicated region
    $region45: #{tpu_custom_call.1} parent=5 // pred_check
      _
    $region46: #{tpu_custom_call.1} parent=5 // pred_check_branch
      %242 = sbr.rel (%p239) target = $region48
    $region47: #{tpu_custom_call.1} parent=5 // pred_region
      %s243 = ssub.s32 %s13, 1
      %s244 = smul.u32 2, %s18
      %p245 = scmp.lt.s32.totalorder %s244, 5
      %s246 = scalar_select %p245, %s244, 5
      %s247 = smul.addr %s246, 4
      %s248 = scalar_lea.vmem %s0, %s247
      %p249 = pneg %p39
      %p250 = pneg %p36
      %p251 = pneg %p60
      %p252 = pneg %p57
      %p253 = pneg %p81
      %p254 = pneg %p78
      %p255 = pneg %p102
      %p256 = pneg %p99
      %p257 = pneg %p123
      %p258 = pneg %p120
      %p259 = pneg %p144
      %p260 = pneg %p141
      %p261 = pneg %p165
      %p262 = pneg %p162
      %p263 = pneg %p191
      %p264 = pneg %p188
      %s265 = smul.u32 2, %s18
      %p266 = scmp.lt.s32.totalorder %s265, 5
      %s267 = scalar_select %p266, %s265, 5
      %s268 = smul.addr %s267, 8
      %s269 = scalar_lea.vmem %s7, %s268
      %s270 = smul.u32 2, %s18
      %p271 = scmp.lt.s32.totalorder %s270, 5
      %s272 = scalar_select %p271, %s270, 5
      %s273 = smul.addr %s272, 4
      %s274 = scalar_lea.vmem %s0, %s273
      %s275 = smul.u32 2, %s18
      %s276 = smul.u32 2, %s18
      %p277 = scmp.lt.s32.totalorder %s276, 5
      %s278 = scalar_select %p277, %s276, 5
      %s279 = smul.addr %s278, 8
      %s280 = scalar_lea.vmem %s7, %s279
      %s281 = smul.u32 2, %s18
      %v283 = vld [vmem:[%s274] sm:$0xf]
      %v284 = vld [vmem:[%s274 + $0x4] sm:$0xf]
      %v285 = vld [vmem:[%s1] sm:$0xf]
      %v286 = vld [vmem:[%s1 + $0x4] sm:$0xf]
      %v287 = vld [vmem:[%s1 + $0x8] sm:$0xf]
      %v288 = vld [vmem:[%s1 + $0xc] sm:$0xf]
      %v289 = vld [vmem:[%s2] sm:$0x1]
      %v290 = vunpack.c.l.bf16 %v289
      %v291 = vlaneseq
      %v292 = vshrl.u32 %v291, 7
      %v293 = vsub.s32 0, %v292
      %v294 = vrot.slane %v290, %v293
      %v297 = vunpack.c.l.b16 %v283
      %v298 = vunpack.c.l.b16 %v284
      %v299 = vpack.c.b16 %v298, %v297
      %v304 = vunpack.c.l.b16 %v285
      %v305 = vunpack.c.l.b16 %v286
      %v306 = vunpack.c.l.b16 %v287
      %v307 = vunpack.c.l.b16 %v288
      %v308 = vpack.c.b16 %v305, %v304
      %v309 = vpack.c.b16 %v307, %v306
      %vm312 = vcmask 261120
      %v314 = vsel %vm312, %v299, 0
      %316 = vmatprep.subr.bf16.mxu0 0
      %317 = vmatpush1.bf16.msra.mxu0 0
      %318 = vmatprep.subr.bf16.mxu0 0
      %319 = vmatpush1.bf16.msra.mxu0 0
      %320 = vmatprep.subr.bf16.mxu0 0
      %321 = vmatpush1.bf16.msra.mxu0 0
      %322 = vmatprep.subr.bf16.mxu0 0
      %323 = vmatpush1.bf16.msra.mxu0 0
      %324 = vmatprep.subr.bf16.mxu0 0
      %325 = vmatpush1.bf16.msra.mxu0 0
      %326 = vmatprep.subr.bf16.mxu0 0
      %327 = vmatpush1.bf16.msra.mxu0 0
      %328 = vmatprep.subr.bf16.mxu0 0
      %329 = vmatpush1.bf16.msra.mxu0 %v309
      %330 = vmatprep.subr.bf16.mxu0 0
      %331 = vmatpush1.bf16.msra.mxu0 %v308
      %332 = vmatprep.subr.bf16.mxu0 0
      %333 = vmatpush2.bf16.msra.mxu0 0
      %334 = vmatprep.subr.bf16.mxu0 0
      %335 = vmatpush2.bf16.msra.mxu0 0
      %336 = vmatprep.subr.bf16.mxu0 0
      %337 = vmatpush2.bf16.msra.mxu0 0
      %338 = vmatprep.subr.bf16.mxu0 0
      %339 = vmatpush2.bf16.msra.mxu0 0
      %340 = vmatprep.subr.bf16.mxu0 0
      %341 = vmatpush2.bf16.msra.mxu0 0
      %342 = vmatprep.subr.bf16.mxu0 0
      %343 = vmatpush2.bf16.msra.mxu0 0
      %344 = vmatprep.subr.bf16.mxu0 0
      %345 = vmatpush2.bf16.msra.mxu0 0
      %346 = vmatprep.subr.bf16.mxu0 0
      %347 = vmatpush2.bf16.msra.mxu0 0
      %348 = vmatprep.mubr.bf16.mxu0 0
      %349 = vmatmul.mubr.bf16.gmra.mxu0 %v314
      %v350 = vpop.f32.mrf.mxu0
      %v351 = vadd.f32 %v294, %v350
      %v352 = vpop.f32.mrf.mxu0
      %v353 = vpop.f32.mrf.mxu0
      %v354 = vadd.f32 %v294, %v353
      %v355 = vpop.f32.mrf.mxu0
      %356 = vdwg.mxu0
      %v357 = vmax.f32 %v351, 0.0
      %v358 = vmax.f32 %v354, 0.0
      %v359 = vpack.c.bf16 %v358, %v357
      %v360 = vld [vmem:[%s3] sm:$0xf]
      %v361 = vld [vmem:[%s3 + $0x4] sm:$0xf]
      %v362 = vld [vmem:[%s3 + $0x8] sm:$0xf]
      %v363 = vld [vmem:[%s3 + $0xc] sm:$0xf]
      %v364 = vld [vmem:[%s3 + $0x10] sm:$0xf]
      %v365 = vld [vmem:[%s3 + $0x14] sm:$0xf]
      %v366 = vld [vmem:[%s3 + $0x18] sm:$0xf]
      %v367 = vld [vmem:[%s3 + $0x1c] sm:$0xf]
      %v368 = vld [vmem:[%s4] sm:$0x1]
      %v369 = vunpack.c.l.bf16 %v368
      %v370 = vlaneseq
      %v371 = vshrl.u32 %v370, 7
      %v372 = vsub.s32 0, %v371
      %v373 = vrot.slane %v369, %v372
      %v382 = vunpack.c.l.b16 %v360
      %v383 = vunpack.c.l.b16 %v361
      %v384 = vunpack.c.l.b16 %v362
      %v385 = vunpack.c.l.b16 %v363
      %v386 = vunpack.c.l.b16 %v364
      %v387 = vunpack.c.l.b16 %v365
      %v388 = vunpack.c.l.b16 %v366
      %v389 = vunpack.c.l.b16 %v367
      %v390 = vpack.c.b16 %v383, %v382
      %v391 = vpack.c.b16 %v385, %v384
      %v392 = vpack.c.b16 %v387, %v386
      %v393 = vpack.c.b16 %v389, %v388
      %vm398 = vcmask 523264
      %v400 = vsel %vm398, %v359, 0
      %402 = vmatprep.subr.bf16.mxu0 0
      %403 = vmatpush1.bf16.msra.mxu0 0
      %404 = vmatprep.subr.bf16.mxu0 0
      %405 = vmatpush1.bf16.msra.mxu0 0
      %406 = vmatprep.subr.bf16.mxu0 0
      %407 = vmatpush1.bf16.msra.mxu0 0
      %408 = vmatprep.subr.bf16.mxu0 0
      %409 = vmatpush1.bf16.msra.mxu0 0
      %410 = vmatprep.subr.bf16.mxu0 0
      %411 = vmatpush1.bf16.msra.mxu0 %v393
      %412 = vmatprep.subr.bf16.mxu0 0
      %413 = vmatpush1.bf16.msra.mxu0 %v392
      %414 = vmatprep.subr.bf16.mxu0 0
      %415 = vmatpush1.bf16.msra.mxu0 %v391
      %416 = vmatprep.subr.bf16.mxu0 0
      %417 = vmatpush1.bf16.msra.mxu0 %v390
      %418 = vmatprep.subr.bf16.mxu0 0
      %419 = vmatpush2.bf16.msra.mxu0 0
      %420 = vmatprep.subr.bf16.mxu0 0
      %421 = vmatpush2.bf16.msra.mxu0 0
      %422 = vmatprep.subr.bf16.mxu0 0
      %423 = vmatpush2.bf16.msra.mxu0 0
      %424 = vmatprep.subr.bf16.mxu0 0
      %425 = vmatpush2.bf16.msra.mxu0 0
      %426 = vmatprep.subr.bf16.mxu0 0
      %427 = vmatpush2.bf16.msra.mxu0 0
      %428 = vmatprep.subr.bf16.mxu0 0
      %429 = vmatpush2.bf16.msra.mxu0 0
      %430 = vmatprep.subr.bf16.mxu0 0
      %431 = vmatpush2.bf16.msra.mxu0 0
      %432 = vmatprep.subr.bf16.mxu0 0
      %433 = vmatpush2.bf16.msra.mxu0 0
      %434 = vmatprep.mubr.bf16.mxu0 0
      %435 = vmatmul.mubr.bf16.gmra.mxu0 %v400
      %v436 = vpop.f32.mrf.mxu0
      %v437 = vadd.f32 %v373, %v436
      %v438 = vpop.f32.mrf.mxu0
      %v439 = vpop.f32.mrf.mxu0
      %v440 = vadd.f32 %v373, %v439
      %v441 = vpop.f32.mrf.mxu0
      %442 = vdwg.mxu0
      %v443 = vmax.f32 %v437, 0.0
      %v444 = vmax.f32 %v440, 0.0
      %v445 = vpack.c.bf16 %v444, %v443
      %v446 = vld [vmem:[%s5] sm:$0xf]
      %v447 = vld [vmem:[%s5 + $0x4] sm:$0xf]
      %v448 = vld [vmem:[%s5 + $0x8] sm:$0xf]
      %v449 = vld [vmem:[%s5 + $0xc] sm:$0xf]
      %v450 = vld [vmem:[%s6] sm:$0x1]
      %v451 = vunpack.c.l.bf16 %v450
      %v452 = vlaneseq
      %v453 = vshrl.u32 %v452, 7
      %v454 = vsub.s32 0, %v453
      %v455 = vrot.slane %v451, %v454
      %v460 = vunpack.c.l.b16 %v446
      %v461 = vunpack.c.l.b16 %v447
      %v462 = vunpack.c.l.b16 %v448
      %v463 = vunpack.c.l.b16 %v449
      %v464 = vpack.c.b16 %v461, %v460
      %v465 = vpack.c.b16 %v463, %v462
      %v469 = vsel %vm312, %v445, 0
      %471 = vmatprep.subr.bf16.mxu0 0
      %472 = vmatpush1.bf16.msra.mxu0 0
      %473 = vmatprep.subr.bf16.mxu0 0
      %474 = vmatpush1.bf16.msra.mxu0 0
      %475 = vmatprep.subr.bf16.mxu0 0
      %476 = vmatpush1.bf16.msra.mxu0 0
      %477 = vmatprep.subr.bf16.mxu0 0
      %478 = vmatpush1.bf16.msra.mxu0 0
      %479 = vmatprep.subr.bf16.mxu0 0
      %480 = vmatpush1.bf16.msra.mxu0 0
      %481 = vmatprep.subr.bf16.mxu0 0
      %482 = vmatpush1.bf16.msra.mxu0 0
      %483 = vmatprep.subr.bf16.mxu0 0
      %484 = vmatpush1.bf16.msra.mxu0 %v465
      %485 = vmatprep.subr.bf16.mxu0 0
      %486 = vmatpush1.bf16.msra.mxu0 %v464
      %487 = vmatprep.subr.bf16.mxu0 0
      %488 = vmatpush2.bf16.msra.mxu0 0
      %489 = vmatprep.subr.bf16.mxu0 0
      %490 = vmatpush2.bf16.msra.mxu0 0
      %491 = vmatprep.subr.bf16.mxu0 0
      %492 = vmatpush2.bf16.msra.mxu0 0
      %493 = vmatprep.subr.bf16.mxu0 0
      %494 = vmatpush2.bf16.msra.mxu0 0
      %495 = vmatprep.subr.bf16.mxu0 0
      %496 = vmatpush2.bf16.msra.mxu0 0
      %497 = vmatprep.subr.bf16.mxu0 0
      %498 = vmatpush2.bf16.msra.mxu0 0
      %499 = vmatprep.subr.bf16.mxu0 0
      %500 = vmatpush2.bf16.msra.mxu0 0
      %501 = vmatprep.subr.bf16.mxu0 0
      %502 = vmatpush2.bf16.msra.mxu0 0
      %503 = vmatprep.mubr.bf16.mxu0 0
      %504 = vmatmul.mubr.bf16.gmra.mxu0 %v469
      %v505 = vpop.f32.mrf.mxu0
      %v506 = vadd.f32 %v455, %v505
      %v507 = vpop.f32.mrf.mxu0
      %v508 = vpop.f32.mrf.mxu0
      %v509 = vadd.f32 %v455, %v508
      %v510 = vpop.f32.mrf.mxu0
      %511 = vdwg.mxu0
      %vm512 = vcmask 23552
      %513 = vst.msk [vmem:[%s280] sm:$0xff] %vm512, %v506
      %514 = vst.msk [vmem:[%s280 + $0x8] sm:$0xff] %vm512, %v509
      %s515 = smul.u32 2, %s18
      %p516 = scmp.lt.s32.totalorder %s515, 5
      %s517 = scalar_select %p516, %s515, 5
      %s518 = smul.addr %s517, 8
      %s519 = scalar_lea.vmem %s7, %s518
      // Predicated region
      $region49: #{tpu_custom_call.1} parent=47 // pred_check
        %p520 = pneg %p188
      $region50: #{tpu_custom_call.1} parent=47 // pred_check_branch
        %522 = sbr.rel (%p520) target = $region52
      $region51: #{tpu_custom_call.1} parent=47 // pred_region
        %s523 = smul.u32 2, %s18
      $region52: #{tpu_custom_call.1} parent=47 // pred_fallthru
        _
    $region48: #{tpu_custom_call.1} parent=5 // pred_fallthru
      _
    %p524 = scmp.le.s32.totalorder 2, %s13
    // Predicated region
    $region53: #{tpu_custom_call.1} parent=5 // pred_check
      %p525 = pneg %p524
    $region54: #{tpu_custom_call.1} parent=5 // pred_check_branch
      %527 = sbr.rel (%p525) target = $region56
    $region55: #{tpu_custom_call.1} parent=5 // pred_region
      %s528 = ssub.s32 %s13, 2
      // Predicated region
      $region57: #{tpu_custom_call.1} parent=55 // pred_check
        %p529 = pneg %p194
      $region58: #{tpu_custom_call.1} parent=55 // pred_check_branch
        %531 = sbr.rel (%p529) target = $region60
      $region59: #{tpu_custom_call.1} parent=55 // pred_region
        %s532 = smul.u32 2, %s19
        %p533 = scmp.lt.s32.totalorder %s532, 5
        %s534 = scalar_select %p533, %s532, 5
        %s535 = smul.addr %s534, 8
        %s536 = scalar_lea.vmem %s7, %s535
      $region60: #{tpu_custom_call.1} parent=55 // pred_fallthru
        _
    $region56: #{tpu_custom_call.1} parent=5 // pred_fallthru
      _
  $region6: #{tpu_custom_call.1} parent=0 // loop_footer
    %s17 = sadd.s32 1, %s13
  $region7: #{tpu_custom_call.1} parent=0 // loop_footer_branch
    %12 = sbr.rel target = $region3
  $region8: #{tpu_custom_call.1} parent=0 // loop_exit
    _

</llo_original>
